<compile_context>
chip_gen: v7x
topology: tpu7x:2x2x1
jax: 0.10.0
libtpu: 0.0.40
codegen_flags: <defaults>
</compile_context>

<pallas_src>
import math

import jax
import jax.numpy as jnp
from jax.experimental import pallas as pl
from jax.experimental.pallas import tpu as pltpu

_LANE = 128
_SUBLANE = 8
_MAX_BATCH_TILE = 256


def _round_up(x, m):
    return ((x + m - 1) // m) * m


def _make_decoder_kernel(conditional, num_layers, widths_pad):
    """Fused decoder kernel.

    Ref order (positional):
      inputs : z, (c if conditional),
               layer 0: (w0z, w0c, b0) if conditional else (w0, b0),
               layer l>0: (wl, bl) ...
      outputs: out_ref (TB, widths_pad[-1])
      scratch: act_ref pltpu.VMEM((TB, max(widths_pad)), f32)
    All weights are stored (in, out) and zero-padded so every layer's output
    width is a multiple of 128 lanes.
    """

    def kernel(*refs):
        if conditional:
            z_ref, c_ref = refs[0], refs[1]
            p = 2
        else:
            z_ref = refs[0]
            p = 1
        out_ref = refs[-2]
        act_ref = refs[-1]

        # ---- layer 0: concat([z, c]) @ W0  ==  z @ W0z + c @ W0c (fused) ----
        if conditional:
            w0z, w0c, b0 = refs[p], refs[p + 1], refs[p + 2]
            p += 3
            y = (jnp.dot(z_ref[...], w0z[...], preferred_element_type=jnp.float32)
                 + jnp.dot(c_ref[...], w0c[...], preferred_element_type=jnp.float32))
        else:
            w0, b0 = refs[p], refs[p + 1]
            p += 2
            y = jnp.dot(z_ref[...], w0[...], preferred_element_type=jnp.float32)
        # ReLU follows every Linear in the reference (Sigmoid branch is dead code).
        y = jnp.maximum(y + b0[...], 0.0)

        if num_layers == 1:
            out_ref[...] = y.astype(out_ref.dtype)
            return
        act_ref[:, : widths_pad[0]] = y

        # ---- layers 1 .. L-1, activation stays in VMEM scratch ----
        for l in range(1, num_layers):
            w_ref, b_ref = refs[p], refs[p + 1]
            p += 2
            x = act_ref[:, : widths_pad[l - 1]]
            y = jnp.dot(x, w_ref[...], preferred_element_type=jnp.float32) + b_ref[...]
            y = jnp.maximum(y, 0.0)
            if l == num_layers - 1:
                out_ref[...] = y.astype(out_ref.dtype)
            else:
                act_ref[:, : widths_pad[l]] = y

    return kernel


class DecoderPallas:
    """JAX/Pallas port of the PyTorch Decoder module (single fused kernel)."""

    def __init__(self, layer_sizes, latent_size, conditional, num_labels, key):
        layer_sizes = list(layer_sizes)
        self.conditional = bool(conditional)
        self.latent_size = latent_size
        if self.conditional:
            layer_sizes[0] += num_labels
        self.layer_sizes = layer_sizes

        self.in_size = layer_sizes[0]
        self.widths = layer_sizes[1:]                       # real output width per layer
        self.num_layers = len(self.widths)
        self.widths_pad = [_round_up(w, _LANE) for w in self.widths]
        self.max_pad = max(self.widths_pad)

        # nn.Linear-style init U(-1/sqrt(in), 1/sqrt(in)); store (in, out),
        # zero-padded to lane-aligned widths.  Keep un-padded copies for checks.
        self.flat_params = []   # padded, flat, matching the kernel's ref order
        self.ref_params = []    # (w (in,out), b (out,)) un-padded, for the pure-JAX reference
        in_sizes = [self.in_size] + self.widths[:-1]
        in_pads = [self.in_size] + self.widths_pad[:-1]     # layer-0 K kept exact
        for l, (fan_in, out) in enumerate(zip(in_sizes, self.widths)):
            key, kw, kb = jax.random.split(key, 3)
            bound = 1.0 / math.sqrt(fan_in)
            w_pt = jax.random.uniform(kw, (out, fan_in), jnp.float32, -bound, bound)
            b = jax.random.uniform(kb, (out,), jnp.float32, -bound, bound)
            w = w_pt.T                                       # (in, out)
            self.ref_params.append((w, b))
            out_pad = self.widths_pad[l]
            if l == 0 and self.conditional:
                wz = jnp.pad(w[: self.latent_size, :], ((0, 0), (0, out_pad - out)))
                wc = jnp.pad(w[self.latent_size:, :], ((0, 0), (0, out_pad - out)))
                self.flat_params += [wz, wc]
            else:
                in_pad = in_pads[l]
                self.flat_params.append(
                    jnp.pad(w, ((0, in_pad - fan_in), (0, out_pad - out))))
            self.flat_params.append(jnp.pad(b, (0, out_pad - out)).reshape(1, out_pad))

        self._forward = jax.jit(self._forward_impl)

    def _forward_impl(self, z, c=None):
        B = z.shape[0]
        # Batch tiling: one tile for small B; 256-row "parallel" tiles for large B.
        TB = min(_round_up(B, _SUBLANE), _MAX_BATCH_TILE)
        B_pad = _round_up(B, TB)
        if B_pad != B:
            z = jnp.pad(z, ((0, B_pad - B), (0, 0)))
            if self.conditional:
                c = jnp.pad(c, ((0, B_pad - B), (0, 0)))

        grid = (B_pad // TB,)
        inputs = [z]
        in_specs = [pl.BlockSpec((TB, z.shape[1]), lambda i: (i, 0))]
        if self.conditional:
            inputs.append(c)
            in_specs.append(pl.BlockSpec((TB, c.shape[1]), lambda i: (i, 0)))
        for p in self.flat_params:
            inputs.append(p)
            # constant block index -> weights stay resident across batch tiles
            in_specs.append(pl.BlockSpec(p.shape, lambda i: (0, 0)))

        out_pad = self.widths_pad[-1]
        kernel = _make_decoder_kernel(self.conditional, self.num_layers,
                                      tuple(self.widths_pad))

        out_padded = pl.pallas_call(
            kernel,
            out_shape=jax.ShapeDtypeStruct((B_pad, out_pad), jnp.float32),
            grid=grid,
            in_specs=in_specs,
            out_specs=pl.BlockSpec((TB, out_pad), lambda i: (i, 0)),
            scratch_shapes=[pltpu.VMEM((TB, self.max_pad), jnp.float32)],
            compiler_params=pltpu.CompilerParams(
                dimension_semantics=("parallel",)),
        )(*inputs)

        # Strip batch and lane padding (inside the same jit-ed program).
        return out_padded[:B, : self.widths[-1]]

    def __call__(self, z, c=None):
        if self.conditional:
            return self._forward(z, c)
        return self._forward(z)


if __name__ == "__main__":
    key = jax.random.PRNGKey(0)

    batch = 8
    latent_size = 32
    num_labels = 16
    layer_sizes = [latent_size, 64, 32]   # decoder: latent(+labels) -> 64 -> 32
    conditional = True

    key, kz, kc, kp = jax.random.split(key, 4)
    z = jax.random.normal(kz, (batch, latent_size), jnp.float32)
    labels = jax.random.randint(kc, (batch,), 0, num_labels)
    c = jax.nn.one_hot(labels, num_labels, dtype=jnp.float32)

    decoder = DecoderPallas(layer_sizes, latent_size, conditional, num_labels, kp)

    out = jax.block_until_ready(decoder(z, c))

    # Cross-check against a plain-JAX reference of the same math (un-padded weights).
    x_ref = jnp.concatenate([z, c], axis=-1)
    for (w, b) in decoder.ref_params:
        x_ref = jnp.maximum(x_ref @ w + b, 0.0)
    assert out.shape == (batch, layer_sizes[-1])
    assert jnp.allclose(out, x_ref, atol=1e-5, rtol=1e-5)

    print("KERNEL_OK")
</pallas_src>

<mosaic_0001>
module attributes {stable_mosaic.version = 11 : i64} {
  func.func @kernel(%arg0: i32, %arg1: memref<8x32xf32, #tpu.memory_space<vmem>>, %arg2: memref<8x16xf32, #tpu.memory_space<vmem>>, %arg3: memref<32x128xf32, #tpu.memory_space<vmem>>, %arg4: memref<16x128xf32, #tpu.memory_space<vmem>>, %arg5: memref<1x128xf32, #tpu.memory_space<vmem>>, %arg6: memref<128x128xf32, #tpu.memory_space<vmem>>, %arg7: memref<1x128xf32, #tpu.memory_space<vmem>>, %arg8: memref<8x128xf32, #tpu.memory_space<vmem>>, %arg9: memref<8x128xf32, #tpu.memory_space<vmem>>) attributes {dimension_semantics = [#tpu.dimension_semantics<parallel>], iteration_bounds = array<i64: 1>, scalar_prefetch = 0 : i64, scratch_operands = 1 : i64, tpu.core_type = #tpu.core_type<tc>, window_params = [{transform_indices = @transform_0, window_bounds = array<i64: 8, 32>}, {transform_indices = @transform_1, window_bounds = array<i64: 8, 16>}, {pipeline_mode = #tpu.pipeline_mode<synchronous>, transform_indices = @transform_2, window_bounds = array<i64: 32, 128>}, {pipeline_mode = #tpu.pipeline_mode<synchronous>, transform_indices = @transform_3, window_bounds = array<i64: 16, 128>}, {pipeline_mode = #tpu.pipeline_mode<synchronous>, transform_indices = @transform_4, window_bounds = array<i64: 1, 128>}, {pipeline_mode = #tpu.pipeline_mode<synchronous>, transform_indices = @transform_5, window_bounds = array<i64: 128, 128>}, {pipeline_mode = #tpu.pipeline_mode<synchronous>, transform_indices = @transform_6, window_bounds = array<i64: 1, 128>}, {transform_indices = @transform_7, window_bounds = array<i64: 8, 128>}]} {
    %c0 = arith.constant 0 : index
    %c0_0 = arith.constant 0 : index
    %0 = vector.load %arg1[%c0, %c0_0] : memref<8x32xf32, #tpu.memory_space<vmem>>, vector<8x32xf32>
    %c0_1 = arith.constant 0 : index
    %c0_2 = arith.constant 0 : index
    %1 = vector.load %arg3[%c0_1, %c0_2] : memref<32x128xf32, #tpu.memory_space<vmem>>, vector<32x128xf32>
    %cst = arith.constant dense<0.000000e+00> : vector<8x128xf32>
    %2 = tpu.matmul %0, %1, %cst {dimension_numbers = #tpu.dot_dimension_numbers<[1], [0], [0], [1], [0, 0, 1, 1], [], []>} : vector<8x32xf32>, vector<32x128xf32>, vector<8x128xf32> -> vector<8x128xf32>
    %c0_3 = arith.constant 0 : index
    %c0_4 = arith.constant 0 : index
    %3 = vector.load %arg2[%c0_3, %c0_4] : memref<8x16xf32, #tpu.memory_space<vmem>>, vector<8x16xf32>
    %c0_5 = arith.constant 0 : index
    %c0_6 = arith.constant 0 : index
    %4 = vector.load %arg4[%c0_5, %c0_6] : memref<16x128xf32, #tpu.memory_space<vmem>>, vector<16x128xf32>
    %cst_7 = arith.constant dense<0.000000e+00> : vector<8x128xf32>
    %5 = tpu.matmul %3, %4, %cst_7 {dimension_numbers = #tpu.dot_dimension_numbers<[1], [0], [0], [1], [0, 0, 1, 1], [], []>} : vector<8x16xf32>, vector<16x128xf32>, vector<8x128xf32> -> vector<8x128xf32>
    %6 = arith.addf %2, %5 : vector<8x128xf32>
    %c0_8 = arith.constant 0 : index
    %c0_9 = arith.constant 0 : index
    %7 = vector.load %arg5[%c0_8, %c0_9] : memref<1x128xf32, #tpu.memory_space<vmem>>, vector<1x128xf32>
    %8 = vector.broadcast %7 : vector<1x128xf32> to vector<8x128xf32>
    %9 = arith.addf %6, %8 : vector<8x128xf32>
    %cst_10 = arith.constant 0.000000e+00 : f32
    %10 = vector.broadcast %cst_10 : f32 to vector<8x128xf32>
    %11 = arith.maximumf %9, %10 : vector<8x128xf32>
    %c0_11 = arith.constant 0 : index
    %c0_12 = arith.constant 0 : index
    %12 = vector.load %arg9[%c0_11, %c0_12] : memref<8x128xf32, #tpu.memory_space<vmem>>, vector<8x128xf32>
    tpu.vector_store %arg9[%c0_11, %c0_12], %11 {strides = array<i32>} : memref<8x128xf32, #tpu.memory_space<vmem>>, vector<8x128xf32>,
    %c0_13 = arith.constant 0 : index
    %c0_14 = arith.constant 0 : index
    %13 = vector.load %arg9[%c0_13, %c0_14] : memref<8x128xf32, #tpu.memory_space<vmem>>, vector<8x128xf32>
    %c0_15 = arith.constant 0 : index
    %c0_16 = arith.constant 0 : index
    %14 = vector.load %arg6[%c0_15, %c0_16] : memref<128x128xf32, #tpu.memory_space<vmem>>, vector<128x128xf32>
    %cst_17 = arith.constant dense<0.000000e+00> : vector<8x128xf32>
    %15 = tpu.matmul %13, %14, %cst_17 {dimension_numbers = #tpu.dot_dimension_numbers<[1], [0], [0], [1], [0, 0, 1, 1], [], []>} : vector<8x128xf32>, vector<128x128xf32>, vector<8x128xf32> -> vector<8x128xf32>
    %c0_18 = arith.constant 0 : index
    %c0_19 = arith.constant 0 : index
    %16 = vector.load %arg7[%c0_18, %c0_19] : memref<1x128xf32, #tpu.memory_space<vmem>>, vector<1x128xf32>
    %17 = vector.broadcast %16 : vector<1x128xf32> to vector<8x128xf32>
    %18 = arith.addf %15, %17 : vector<8x128xf32>
    %cst_20 = arith.constant 0.000000e+00 : f32
    %19 = vector.broadcast %cst_20 : f32 to vector<8x128xf32>
    %20 = arith.maximumf %18, %19 : vector<8x128xf32>
    %c0_21 = arith.constant 0 : index
    %c0_22 = arith.constant 0 : index
    %21 = vector.load %arg8[%c0_21, %c0_22] : memref<8x128xf32, #tpu.memory_space<vmem>>, vector<8x128xf32>
    tpu.vector_store %arg8[%c0_21, %c0_22], %20 {strides = array<i32>} : memref<8x128xf32, #tpu.memory_space<vmem>>, vector<8x128xf32>,
    return
  }
  func.func @transform_0(%arg0: i32) -> (i32, i32) {
    %c0_i32 = arith.constant 0 : i32
    %c0_i32_0 = arith.constant 0 : i32
    return %arg0, %c0_i32 : i32, i32
  }
  func.func @transform_1(%arg0: i32) -> (i32, i32) {
    %c0_i32 = arith.constant 0 : i32
    %c0_i32_0 = arith.constant 0 : i32
    return %arg0, %c0_i32 : i32, i32
  }
  func.func @transform_2(%arg0: i32) -> (i32, i32) {
    %c0_i32 = arith.constant 0 : i32
    %c0_i32_0 = arith.constant 0 : i32
    %c0_i32_1 = arith.constant 0 : i32
    return %c0_i32, %c0_i32_0 : i32, i32
  }
  func.func @transform_3(%arg0: i32) -> (i32, i32) {
    %c0_i32 = arith.constant 0 : i32
    %c0_i32_0 = arith.constant 0 : i32
    %c0_i32_1 = arith.constant 0 : i32
    return %c0_i32, %c0_i32_0 : i32, i32
  }
  func.func @transform_4(%arg0: i32) -> (i32, i32) {
    %c0_i32 = arith.constant 0 : i32
    %c0_i32_0 = arith.constant 0 : i32
    %c0_i32_1 = arith.constant 0 : i32
    return %c0_i32, %c0_i32_0 : i32, i32
  }
  func.func @transform_5(%arg0: i32) -> (i32, i32) {
    %c0_i32 = arith.constant 0 : i32
    %c0_i32_0 = arith.constant 0 : i32
    %c0_i32_1 = arith.constant 0 : i32
    return %c0_i32, %c0_i32_0 : i32, i32
  }
  func.func @transform_6(%arg0: i32) -> (i32, i32) {
    %c0_i32 = arith.constant 0 : i32
    %c0_i32_0 = arith.constant 0 : i32
    %c0_i32_1 = arith.constant 0 : i32
    return %c0_i32, %c0_i32_0 : i32, i32
  }
  func.func @transform_7(%arg0: i32) -> (i32, i32) {
    %c0_i32 = arith.constant 0 : i32
    %c0_i32_0 = arith.constant 0 : i32
    return %arg0, %c0_i32 : i32, i32
  }
}

</mosaic_0001>

<llo_original>
// kernel: _forward_impl.1
$region0: #{_forward_impl.1}
  #allocation0 [shape = 'u32[]', space=smem, size = 0x4, offset = 0x4, fixed_abs, tag = 'smem constant byte address 0x4 - core index']
  #allocation1 [shape = 'u32[144,128]{1,0:T(1,128)}', space=vmem, size = 0x12000, scoped, tag = 'internal scratch']
  #allocation2 [shape = 'f32[8,128]{1,0:T(8,128)}', space=vmem, size = 0x1000, scoped, tag = 'scratch operand']
  %s0 = inlined_call_operand.hbm [shape: f32[8,32], index: 0, kind: input, shape index: {}]
  %s1 = inlined_call_operand.hbm [shape: f32[8,16], index: 1, kind: input, shape index: {}]
  %s2 = inlined_call_operand.hbm [shape: f32[32,128], index: 2, kind: input, shape index: {}]
  %s3 = inlined_call_operand.hbm [shape: f32[16,128], index: 3, kind: input, shape index: {}]
  %s4 = inlined_call_operand.vmem [shape: f32[1,128], index: 4, kind: input, shape index: {}]
  %s5 = inlined_call_operand.hbm [shape: f32[128,128], index: 5, kind: input, shape index: {}]
  %s6 = inlined_call_operand.vmem [shape: f32[1,128], index: 6, kind: input, shape index: {}]
  %s7 = inlined_call_operand.hbm [shape: f32[8,128], index: 7, kind: output, shape index: {}]
  %s8 = sld [smem:[#allocation0]]
  $region58: #{_forward_impl.1} parent=0
    _
  %s10 = ssub.s32 1, %s8
  %s11 = scalar_select 0, %s10, %s8
  $region1: #{_forward_impl.1} parent=0
    #allocation3 [shape = 'u8[4096]{0}', space=vmem, size = 0x1000, scoped, tag = 'input window, operand 0, single buffered']
    #allocation4 [shape = 's32[1]{0}', space=sflag, size = 0x4, scoped, tag = 'scoped memory for _forward_impl.1']
    #allocation5 [shape = 's32[1]{0}', space=sflag, size = 0x4, scoped, tag = 'scoped memory for _forward_impl.1']
    #allocation6 [shape = 'u8[4096]{0}', space=vmem, size = 0x1000, scoped, tag = 'input window, operand 1, single buffered']
    #allocation7 [shape = 's32[1]{0}', space=sflag, size = 0x4, scoped, tag = 'scoped memory for _forward_impl.1']
    #allocation8 [shape = 'u8[16384]{0}', space=vmem, size = 0x4000, scoped, tag = 'input window, operand 2, single buffered']
    #allocation9 [shape = 'u8[8192]{0}', space=vmem, size = 0x2000, scoped, tag = 'input window, operand 3, single buffered']
    #allocation10 [shape = 's32[1]{0}', space=sflag, size = 0x4, scoped, tag = 'scoped memory for _forward_impl.1']
    #allocation11 [shape = 'u8[65536]{0}', space=vmem, size = 0x10000, scoped, tag = 'input window, operand 5, single buffered']
    #allocation12 [shape = 'u8[4096]{0}', space=vmem, size = 0x1000, scoped, tag = 'output window, operand 0, single buffered']
    %12 = vsyncpa [#allocation4], 0
    %13 = vsyncpa [#allocation7], 0
    %14 = vsyncpa [#allocation10], 0
    %15 = vsyncpa [#allocation5], 0
    // Predicated region
    $region2: #{_forward_impl.1} parent=1 // pred_check
      _
    $region3: #{_forward_impl.1} parent=1 // pred_check_branch
      %17 = sbr.rel (0) target = $region5
    $region4: #{_forward_impl.1} parent=1 // pred_region
      %s19 = ssub.s32 128, 128
      %20 = vsyncadd [#allocation4], %s19
      %s22 = sshll.u32 [#allocation3], 4
      %s23 = int_to_ptr.vmem [resolvable:$true] %s22
      %25 = dma.hbm_to_vmem [thread:$0]  %s0, 128, %s23, [#allocation4]
    $region5: #{_forward_impl.1} parent=1 // pred_fallthru
      _
    // Predicated region
    $region6: #{_forward_impl.1} parent=1 // pred_check
      _
    $region7: #{_forward_impl.1} parent=1 // pred_check_branch
      %27 = sbr.rel (0) target = $region9
    $region8: #{_forward_impl.1} parent=1 // pred_region
      %s29 = ssub.s32 128, 128
      %30 = vsyncadd [#allocation7], %s29
      %s32 = sshll.u32 [#allocation6], 4
      %s33 = int_to_ptr.vmem [resolvable:$true] %s32
      %35 = dma.hbm_to_vmem [thread:$0]  %s1, 128, %s33, [#allocation7]
    $region9: #{_forward_impl.1} parent=1 // pred_fallthru
      _
    // Predicated region
    $region10: #{_forward_impl.1} parent=1 // pred_check
      _
    $region11: #{_forward_impl.1} parent=1 // pred_check_branch
      %37 = sbr.rel (0) target = $region13
    $region12: #{_forward_impl.1} parent=1 // pred_region
      %s39 = ssub.s32 512, 512
      %40 = vsyncadd [#allocation7], %s39
      %s41 = sshll.u32 [#allocation8], 4
      %s42 = int_to_ptr.vmem [resolvable:$true] %s41
      %47 = dma.hbm_to_vmem [thread:$0]  %s2, 512, %s42, [#allocation7], 128, 128, 8
    $region13: #{_forward_impl.1} parent=1 // pred_fallthru
      _
    // Predicated region
    $region14: #{_forward_impl.1} parent=1 // pred_check
      _
    $region15: #{_forward_impl.1} parent=1 // pred_check_branch
      %49 = sbr.rel (0) target = $region17
    $region16: #{_forward_impl.1} parent=1 // pred_region
      %s51 = ssub.s32 256, 256
      %52 = vsyncadd [#allocation10], %s51
      %s53 = sshll.u32 [#allocation9], 4
      %s54 = int_to_ptr.vmem [resolvable:$true] %s53
      %59 = dma.hbm_to_vmem [thread:$0]  %s3, 256, %s54, [#allocation10], 128, 128, 8
    $region17: #{_forward_impl.1} parent=1 // pred_fallthru
      _
    // Predicated region
    $region18: #{_forward_impl.1} parent=1 // pred_check
      _
    $region19: #{_forward_impl.1} parent=1 // pred_check_branch
      %61 = sbr.rel (0) target = $region21
    $region20: #{_forward_impl.1} parent=1 // pred_region
      _
    $region21: #{_forward_impl.1} parent=1 // pred_fallthru
      _
    // Predicated region
    $region22: #{_forward_impl.1} parent=1 // pred_check
      _
    $region23: #{_forward_impl.1} parent=1 // pred_check_branch
      %63 = sbr.rel (0) target = $region25
    $region24: #{_forward_impl.1} parent=1 // pred_region
      %s65 = ssub.s32 2048, 2048
      %66 = vsyncadd [#allocation10], %s65
      %s67 = sshll.u32 [#allocation11], 4
      %s68 = int_to_ptr.vmem [resolvable:$true] %s67
      %73 = dma.hbm_to_vmem [thread:$0]  %s5, 2048, %s68, [#allocation10], 128, 128, 8
    $region25: #{_forward_impl.1} parent=1 // pred_fallthru
      _
    // Predicated region
    $region26: #{_forward_impl.1} parent=1 // pred_check
      _
    $region27: #{_forward_impl.1} parent=1 // pred_check_branch
      %75 = sbr.rel (0) target = $region29
    $region28: #{_forward_impl.1} parent=1 // pred_region
      _
    $region29: #{_forward_impl.1} parent=1 // pred_fallthru
      _
    // Predicated region
    $region30: #{_forward_impl.1} parent=1 // pred_check
      _
    $region31: #{_forward_impl.1} parent=1 // pred_check_branch
      %77 = sbr.rel (0) target = $region33
    $region32: #{_forward_impl.1} parent=1 // pred_region
      %78 = dma.done [#allocation4], 128
    $region33: #{_forward_impl.1} parent=1 // pred_fallthru
      _
    // Predicated region
    $region34: #{_forward_impl.1} parent=1 // pred_check
      _
    $region35: #{_forward_impl.1} parent=1 // pred_check_branch
      %80 = sbr.rel (0) target = $region37
    $region36: #{_forward_impl.1} parent=1 // pred_region
      %81 = dma.done [#allocation7], 128
    $region37: #{_forward_impl.1} parent=1 // pred_fallthru
      _
    // Predicated region
    $region38: #{_forward_impl.1} parent=1 // pred_check
      _
    $region39: #{_forward_impl.1} parent=1 // pred_check_branch
      %83 = sbr.rel (0) target = $region41
    $region40: #{_forward_impl.1} parent=1 // pred_region
      %84 = dma.done [#allocation7], 512
    $region41: #{_forward_impl.1} parent=1 // pred_fallthru
      _
    // Predicated region
    $region42: #{_forward_impl.1} parent=1 // pred_check
      _
    $region43: #{_forward_impl.1} parent=1 // pred_check_branch
      %86 = sbr.rel (0) target = $region45
    $region44: #{_forward_impl.1} parent=1 // pred_region
      %87 = dma.done [#allocation10], 256
    $region45: #{_forward_impl.1} parent=1 // pred_fallthru
      _
    // Predicated region
    $region46: #{_forward_impl.1} parent=1 // pred_check
      _
    $region47: #{_forward_impl.1} parent=1 // pred_check_branch
      %89 = sbr.rel (0) target = $region49
    $region48: #{_forward_impl.1} parent=1 // pred_region
      %90 = dma.done [#allocation10], 2048
    $region49: #{_forward_impl.1} parent=1 // pred_fallthru
      _
    %v91 = vld [vmem:[#allocation3] sm:$0xff]
    %v92 = vld [vmem:[#allocation8] sm:$0xff]
    %v93 = vld [vmem:[#allocation8 + $0x8] sm:$0xff]
    %v94 = vld [vmem:[#allocation8 + $0x10] sm:$0xff]
    %v95 = vld [vmem:[#allocation8 + $0x18] sm:$0xff]
    %v96 = vld [vmem:[#allocation6] sm:$0xff]
    %v97 = vld [vmem:[#allocation9] sm:$0xff]
    %v98 = vld [vmem:[#allocation9 + $0x8] sm:$0xff]
    %vm99 = vcmask 130048
    %v101 = vsel %vm99, %v96, 0
    %103 = vmatprep.subr.mxu0 0.0
    %104 = vmatpush1.msra.mxu0 %v97
    %105 = vmatprep.subr.mxu0 0.0
    %106 = vmatpush1.msra.mxu0 %v98
    %107 = vmatprep.subr.mxu0 0.0
    %108 = vmatpush1.msra.mxu0 0.0
    %109 = vmatprep.subr.mxu0 0.0
    %110 = vmatpush1.msra.mxu0 0.0
    %111 = vmatprep.subr.mxu0 0.0
    %112 = vmatpush1.msra.mxu0 0.0
    %113 = vmatprep.subr.mxu0 0.0
    %114 = vmatpush1.msra.mxu0 0.0
    %115 = vmatprep.subr.mxu0 0.0
    %116 = vmatpush1.msra.mxu0 0.0
    %117 = vmatprep.subr.mxu0 0.0
    %118 = vmatpush1.msra.mxu0 0.0
    %119 = vmatprep.subr.mxu0 0.0
    %120 = vmatpush1.msra.mxu0 0.0
    %121 = vmatprep.subr.mxu0 0.0
    %122 = vmatpush1.msra.mxu0 0.0
    %123 = vmatprep.subr.mxu0 0.0
    %124 = vmatpush1.msra.mxu0 0.0
    %125 = vmatprep.subr.mxu0 0.0
    %126 = vmatpush1.msra.mxu0 0.0
    %127 = vmatprep.subr.mxu0 0.0
    %128 = vmatpush1.msra.mxu0 0.0
    %129 = vmatprep.subr.mxu0 0.0
    %130 = vmatpush1.msra.mxu0 0.0
    %131 = vmatprep.subr.mxu0 0.0
    %132 = vmatpush1.msra.mxu0 0.0
    %133 = vmatprep.subr.mxu0 0.0
    %134 = vmatpush1.msra.mxu0 0.0
    %135 = vmatprep.subr.mxu0 0.0
    %136 = vmatpush1.msra.mxu0 0.0
    %137 = vmatprep.subr.mxu0 0.0
    %138 = vmatpush1.msra.mxu0 0.0
    %139 = vmatprep.subr.mxu0 0.0
    %140 = vmatpush1.msra.mxu0 0.0
    %141 = vmatprep.subr.mxu0 0.0
    %142 = vmatpush1.msra.mxu0 0.0
    %143 = vmatprep.subr.mxu0 0.0
    %144 = vmatpush1.msra.mxu0 0.0
    %145 = vmatprep.subr.mxu0 0.0
    %146 = vmatpush1.msra.mxu0 0.0
    %147 = vmatprep.subr.mxu0 0.0
    %148 = vmatpush1.msra.mxu0 0.0
    %149 = vmatprep.subr.mxu0 0.0
    %150 = vmatpush1.msra.mxu0 0.0
    %151 = vmatprep.subr.mxu0 0.0
    %152 = vmatpush1.msra.mxu0 0.0
    %153 = vmatprep.subr.mxu0 0.0
    %154 = vmatpush1.msra.mxu0 0.0
    %155 = vmatprep.subr.mxu0 0.0
    %156 = vmatpush1.msra.mxu0 0.0
    %157 = vmatprep.subr.mxu0 0.0
    %158 = vmatpush1.msra.mxu0 0.0
    %159 = vmatprep.subr.mxu0 0.0
    %160 = vmatpush1.msra.mxu0 0.0
    %161 = vmatprep.subr.mxu0 0.0
    %162 = vmatpush1.msra.mxu0 0.0
    %163 = vmatprep.subr.mxu0 0.0
    %164 = vmatpush1.msra.mxu0 0.0
    %165 = vmatprep.subr.mxu0 0.0
    %166 = vmatpush1.msra.mxu0 0.0
    %167 = vmatprep.mubr.f32.mxu0 0.0
    %168 = vmatmul.mubr.f32.gmra.mrb[0].mxu0 %v101
    %v169 = vpop.f32.mrb[0].mxu0
    %v170 = vadd.f32 0.0, %v169
    %v171 = vpop.f32.mrb[0].mxu0
    %172 = vdwg.mxu0
    %vm173 = vcmask 261120
    %v175 = vsel %vm173, %v91, 0
    %177 = vmatprep.subr.mxu0 0.0
    %178 = vmatpush1.msra.mxu0 %v92
    %179 = vmatprep.subr.mxu0 0.0
    %180 = vmatpush1.msra.mxu0 %v93
    %181 = vmatprep.subr.mxu0 0.0
    %182 = vmatpush1.msra.mxu0 %v94
    %183 = vmatprep.subr.mxu0 0.0
    %184 = vmatpush1.msra.mxu0 %v95
    %185 = vmatprep.subr.mxu0 0.0
    %186 = vmatpush1.msra.mxu0 0.0
    %187 = vmatprep.subr.mxu0 0.0
    %188 = vmatpush1.msra.mxu0 0.0
    %189 = vmatprep.subr.mxu0 0.0
    %190 = vmatpush1.msra.mxu0 0.0
    %191 = vmatprep.subr.mxu0 0.0
    %192 = vmatpush1.msra.mxu0 0.0
    %193 = vmatprep.subr.mxu0 0.0
    %194 = vmatpush1.msra.mxu0 0.0
    %195 = vmatprep.subr.mxu0 0.0
    %196 = vmatpush1.msra.mxu0 0.0
    %197 = vmatprep.subr.mxu0 0.0
    %198 = vmatpush1.msra.mxu0 0.0
    %199 = vmatprep.subr.mxu0 0.0
    %200 = vmatpush1.msra.mxu0 0.0
    %201 = vmatprep.subr.mxu0 0.0
    %202 = vmatpush1.msra.mxu0 0.0
    %203 = vmatprep.subr.mxu0 0.0
    %204 = vmatpush1.msra.mxu0 0.0
    %205 = vmatprep.subr.mxu0 0.0
    %206 = vmatpush1.msra.mxu0 0.0
    %207 = vmatprep.subr.mxu0 0.0
    %208 = vmatpush1.msra.mxu0 0.0
    %209 = vmatprep.subr.mxu0 0.0
    %210 = vmatpush1.msra.mxu0 0.0
    %211 = vmatprep.subr.mxu0 0.0
    %212 = vmatpush1.msra.mxu0 0.0
    %213 = vmatprep.subr.mxu0 0.0
    %214 = vmatpush1.msra.mxu0 0.0
    %215 = vmatprep.subr.mxu0 0.0
    %216 = vmatpush1.msra.mxu0 0.0
    %217 = vmatprep.subr.mxu0 0.0
    %218 = vmatpush1.msra.mxu0 0.0
    %219 = vmatprep.subr.mxu0 0.0
    %220 = vmatpush1.msra.mxu0 0.0
    %221 = vmatprep.subr.mxu0 0.0
    %222 = vmatpush1.msra.mxu0 0.0
    %223 = vmatprep.subr.mxu0 0.0
    %224 = vmatpush1.msra.mxu0 0.0
    %225 = vmatprep.subr.mxu0 0.0
    %226 = vmatpush1.msra.mxu0 0.0
    %227 = vmatprep.subr.mxu0 0.0
    %228 = vmatpush1.msra.mxu0 0.0
    %229 = vmatprep.subr.mxu0 0.0
    %230 = vmatpush1.msra.mxu0 0.0
    %231 = vmatprep.subr.mxu0 0.0
    %232 = vmatpush1.msra.mxu0 0.0
    %233 = vmatprep.subr.mxu0 0.0
    %234 = vmatpush1.msra.mxu0 0.0
    %235 = vmatprep.subr.mxu0 0.0
    %236 = vmatpush1.msra.mxu0 0.0
    %237 = vmatprep.subr.mxu0 0.0
    %238 = vmatpush1.msra.mxu0 0.0
    %239 = vmatprep.subr.mxu0 0.0
    %240 = vmatpush1.msra.mxu0 0.0
    %241 = vmatprep.mubr.f32.mxu0 0.0
    %242 = vmatmul.mubr.f32.gmra.mrb[0].mxu0 %v175
    %v243 = vpop.f32.mrb[0].mxu0
    %v244 = vadd.f32 %v170, %v243
    %v245 = vpop.f32.mrb[0].mxu0
    %246 = vdwg.mxu0
    %v247 = vld [vmem:[%s4] sm:$0x1]
    %v249 = vlaneseq
    %v250 = vshrl.u32 %v249, 7
    %v251 = vsub.s32 0, %v250
    %v252 = vrot.slane %v247, %v251
    %v254 = vadd.f32 %v244, %v252
    %v255 = vmax.f32 %v254, 0.0
    %256 = vst [vmem:[#allocation2] sm:$0xff] %v255
    %v257 = vld [vmem:[#allocation2] sm:$0xff]
    %v258 = vld [vmem:[#allocation11] sm:$0xff]
    %v259 = vld [vmem:[#allocation11 + $0x8] sm:$0xff]
    %v260 = vld [vmem:[#allocation11 + $0x10] sm:$0xff]
    %v261 = vld [vmem:[#allocation11 + $0x18] sm:$0xff]
    %v262 = vld [vmem:[#allocation11 + $0x20] sm:$0xff]
    %v263 = vld [vmem:[#allocation11 + $0x28] sm:$0xff]
    %v264 = vld [vmem:[#allocation11 + $0x30] sm:$0xff]
    %v265 = vld [vmem:[#allocation11 + $0x38] sm:$0xff]
    %v266 = vld [vmem:[#allocation11 + $0x40] sm:$0xff]
    %v267 = vld [vmem:[#allocation11 + $0x48] sm:$0xff]
    %v268 = vld [vmem:[#allocation11 + $0x50] sm:$0xff]
    %v269 = vld [vmem:[#allocation11 + $0x58] sm:$0xff]
    %v270 = vld [vmem:[#allocation11 + $0x60] sm:$0xff]
    %v271 = vld [vmem:[#allocation11 + $0x68] sm:$0xff]
    %v272 = vld [vmem:[#allocation11 + $0x70] sm:$0xff]
    %v273 = vld [vmem:[#allocation11 + $0x78] sm:$0xff]
    %v274 = vld [vmem:[%s6] sm:$0x1]
    %v276 = vlaneseq
    %v277 = vshrl.u32 %v276, 7
    %v278 = vsub.s32 0, %v277
    %v279 = vrot.slane %v274, %v278
    %281 = vmatprep.subr.mxu0 0.0
    %282 = vmatpush1.msra.mxu0 %v258
    %283 = vmatprep.subr.mxu0 0.0
    %284 = vmatpush1.msra.mxu0 %v259
    %285 = vmatprep.subr.mxu0 0.0
    %286 = vmatpush1.msra.mxu0 %v260
    %287 = vmatprep.subr.mxu0 0.0
    %288 = vmatpush1.msra.mxu0 %v261
    %289 = vmatprep.subr.mxu0 0.0
    %290 = vmatpush1.msra.mxu0 %v262
    %291 = vmatprep.subr.mxu0 0.0
    %292 = vmatpush1.msra.mxu0 %v263
    %293 = vmatprep.subr.mxu0 0.0
    %294 = vmatpush1.msra.mxu0 %v264
    %295 = vmatprep.subr.mxu0 0.0
    %296 = vmatpush1.msra.mxu0 %v265
    %297 = vmatprep.subr.mxu0 0.0
    %298 = vmatpush1.msra.mxu0 %v266
    %299 = vmatprep.subr.mxu0 0.0
    %300 = vmatpush1.msra.mxu0 %v267
    %301 = vmatprep.subr.mxu0 0.0
    %302 = vmatpush1.msra.mxu0 %v268
    %303 = vmatprep.subr.mxu0 0.0
    %304 = vmatpush1.msra.mxu0 %v269
    %305 = vmatprep.subr.mxu0 0.0
    %306 = vmatpush1.msra.mxu0 %v270
    %307 = vmatprep.subr.mxu0 0.0
    %308 = vmatpush1.msra.mxu0 %v271
    %309 = vmatprep.subr.mxu0 0.0
    %310 = vmatpush1.msra.mxu0 %v272
    %311 = vmatprep.subr.mxu0 0.0
    %312 = vmatpush1.msra.mxu0 %v273
    %313 = vmatprep.subr.mxu0 0.0
    %314 = vmatpush1.msra.mxu0 0.0
    %315 = vmatprep.subr.mxu0 0.0
    %316 = vmatpush1.msra.mxu0 0.0
    %317 = vmatprep.subr.mxu0 0.0
    %318 = vmatpush1.msra.mxu0 0.0
    %319 = vmatprep.subr.mxu0 0.0
    %320 = vmatpush1.msra.mxu0 0.0
    %321 = vmatprep.subr.mxu0 0.0
    %322 = vmatpush1.msra.mxu0 0.0
    %323 = vmatprep.subr.mxu0 0.0
    %324 = vmatpush1.msra.mxu0 0.0
    %325 = vmatprep.subr.mxu0 0.0
    %326 = vmatpush1.msra.mxu0 0.0
    %327 = vmatprep.subr.mxu0 0.0
    %328 = vmatpush1.msra.mxu0 0.0
    %329 = vmatprep.subr.mxu0 0.0
    %330 = vmatpush1.msra.mxu0 0.0
    %331 = vmatprep.subr.mxu0 0.0
    %332 = vmatpush1.msra.mxu0 0.0
    %333 = vmatprep.subr.mxu0 0.0
    %334 = vmatpush1.msra.mxu0 0.0
    %335 = vmatprep.subr.mxu0 0.0
    %336 = vmatpush1.msra.mxu0 0.0
    %337 = vmatprep.subr.mxu0 0.0
    %338 = vmatpush1.msra.mxu0 0.0
    %339 = vmatprep.subr.mxu0 0.0
    %340 = vmatpush1.msra.mxu0 0.0
    %341 = vmatprep.subr.mxu0 0.0
    %342 = vmatpush1.msra.mxu0 0.0
    %343 = vmatprep.subr.mxu0 0.0
    %344 = vmatpush1.msra.mxu0 0.0
    %345 = vmatprep.mubr.f32.mxu0 0.0
    %346 = vmatmul.mubr.f32.gmra.mrb[0].mxu0 %v257
    %v347 = vpop.f32.mrb[0].mxu0
    %v348 = vadd.f32 %v279, %v347
    %v349 = vpop.f32.mrb[0].mxu0
    %350 = vdwg.mxu0
    %v351 = vmax.f32 %v348, 0.0
    %352 = vst [vmem:[#allocation12] sm:$0xff] %v351
    // Predicated region
    $region50: #{_forward_impl.1} parent=1 // pred_check
      _
    $region51: #{_forward_impl.1} parent=1 // pred_check_branch
      %354 = sbr.rel (0) target = $region53
    $region52: #{_forward_impl.1} parent=1 // pred_region
      %s356 = ssub.s32 128, 128
      %357 = vsyncadd [#allocation5], %s356
      %s359 = sshll.u32 [#allocation12], 4
      %s360 = int_to_ptr.vmem [resolvable:$true] %s359
      %362 = dma.vmem_to_hbm [thread:$0]  %s360, 128, %s7, [#allocation5]
    $region53: #{_forward_impl.1} parent=1 // pred_fallthru
      _
    // Predicated region
    $region54: #{_forward_impl.1} parent=1 // pred_check
      _
    $region55: #{_forward_impl.1} parent=1 // pred_check_branch
      %364 = sbr.rel (0) target = $region57
    $region56: #{_forward_impl.1} parent=1 // pred_region
      %365 = dma.done [#allocation5], 128
    $region57: #{_forward_impl.1} parent=1 // pred_fallthru
      _
    %366 = vsyncpa [#allocation4], 1
    %367 = vsyncpa [#allocation7], 1
    %368 = vsyncpa [#allocation10], 1
    %369 = vsyncpa [#allocation5], 1

</llo_original>
